<compile_context>
chip_gen: v6e
topology: v6e:2x2x1
jax: 0.10.0
libtpu: 0.0.40
codegen_flags: <defaults>
</compile_context>

<pallas_src>
import jax
import jax.numpy as jnp
from jax.experimental import pallas as pl
from jax.experimental.pallas import tpu as pltpu

_LANES = 128
_PAIRS_PER_ROW = _LANES // 2          # 64 voxels per lane-dense row when C == 2
_VMEM_LIMIT_BYTES = 32 * 1024 * 1024  # safe on v5e/v6e (128 MiB) and v7x (64 MiB)
_MIN_BLOCK_ROWS = 2048                # ~1 MiB f32 per block; below this the
                                      # ~0.35 us per-step overhead dominates


def _round_up(x, m):
    return ((x + m - 1) // m) * m


def _sublane(dtype):
    # bf16 packs (16, 128) per vreg; keep block rows a multiple of the packing.
    return 16 if dtype == jnp.bfloat16 else 8


def _choose_block_rows(rows, max_block, sublane, min_steps=4):
    """Largest block that amortizes per-step cost, while keeping >= min_steps
    grid steps when there is enough data (v7x dual-TC sharding + DMA overlap)."""
    block = min(max_block, _round_up(rows, sublane))
    if rows >= min_steps * _MIN_BLOCK_ROWS:
        cap = max(_MIN_BLOCK_ROWS, _round_up(pl.cdiv(rows, min_steps), sublane))
        block = min(block, cap)
    return max(block, sublane)


def _compiler_params():
    return pltpu.CompilerParams(
        dimension_semantics=("parallel",),
        vmem_limit_bytes=_VMEM_LIMIT_BYTES,
    )


# --------------------------------------------------------------------------
# C == 2 fast path: lane-dense logit-threshold compare
# --------------------------------------------------------------------------
def _selection_c2_kernel(thr_ref, x_ref, o_ref):
    # x_ref/o_ref: (block_rows, 128) tile.  Even lanes hold class-0 scores,
    # odd lanes hold class-1 scores (row-major view of [N, 2]).
    x = x_ref[...]
    if x.dtype != jnp.float32:
        x = x.astype(jnp.float32)
    thr = thr_ref[0, 0]                                   # logit-space threshold

    # d[j] = x[j] - x[j-1]; at odd lanes this is (class1 - class0) of the pair.
    d = x - pltpu.roll(x, shift=1, axis=1)
    flag = (d > thr).astype(jnp.float32)                  # valid at odd lanes
    flag_next = pltpu.roll(flag, shift=_LANES - 1, axis=1)  # flag[j + 1]

    lane = jax.lax.broadcasted_iota(jnp.int32, x.shape, 1)
    is_odd = (lane & 1) == 1
    o_ref[...] = jnp.where(is_odd, flag, flag_next).astype(o_ref.dtype)


def _selection_forward_c2(features, threshold, max_block_rows=8192):
    n, _ = features.shape
    dtype = features.dtype

    # softmax(x)[1] > t  <=>  x1 - x0 > log(t / (1 - t))
    t = jnp.asarray(threshold, jnp.float32)
    logit_thr = (jnp.log(t) - jnp.log1p(-t)).reshape(1, 1)

    rows = pl.cdiv(n, _PAIRS_PER_ROW)
    n_folded = rows * _PAIRS_PER_ROW
    x = features
    if n_folded != n:
        # Ragged tail: pad <= 63 voxels so the lane-dense view below is legal.
        x = jnp.pad(x, ((0, n_folded - n), (0, 0)))
    # Free row-major view: 64 (class0, class1) pairs per 128-lane row.
    x = x.reshape(rows, _LANES)

    sub = _sublane(dtype)
    block_rows = _choose_block_rows(rows, max_block_rows, sub)

    out = pl.pallas_call(
        _selection_c2_kernel,
        out_shape=jax.ShapeDtypeStruct((rows, _LANES), dtype),
        grid=(pl.cdiv(rows, block_rows),),            # partial last block masked
        in_specs=[
            pl.BlockSpec(memory_space=pltpu.MemorySpace.SMEM),     # threshold
            pl.BlockSpec((block_rows, _LANES), lambda i: (i, 0)),  # scores
        ],
        out_specs=pl.BlockSpec((block_rows, _LANES), lambda i: (i, 0)),
        compiler_params=_compiler_params(),
    )(logit_thr, x)

    out = out.reshape(n_folded, 2)
    if n_folded != n:
        out = out[:n]
    return out


# --------------------------------------------------------------------------
# Lane-dense general path: C is a power-of-two divisor of 128 (4, 8, 16, ...)
# --------------------------------------------------------------------------
def _make_lane_dense_kernel(c):
    """Kernel for C-class selection with C | 128.  Input viewed as (rows, 128)
    containing 128 // C aligned groups of C lanes per row."""
    log2c = c.bit_length() - 1

    def kernel(thr_ref, x_ref, o_ref):
        x = x_ref[...]
        if x.dtype != jnp.float32:
            x = x.astype(jnp.float32)
        thr = thr_ref[0, 0]
        lane = jax.lax.broadcasted_iota(jnp.int32, x.shape, 1)

        def butterfly(v, combine):
            # XOR-partner hypercube reduction within aligned C-lane groups;
            # two XLU rolls + one select per step (free while memory bound).
            for k in range(log2c):
                s = 1 << k
                up = pltpu.roll(v, shift=_LANES - s, axis=1)   # v[j + s]
                dn = pltpu.roll(v, shift=s, axis=1)            # v[j - s]
                partner = jnp.where((lane & s) == 0, up, dn)
                v = combine(v, partner)
            return v

        m = butterfly(x, jnp.maximum)                      # per-group max
        e = jnp.exp(x - m)
        denom = butterfly(e, jnp.add)                      # per-group sum(exp)
        pos1 = (lane & (c - 1)) == 1                       # class-1 lane of group
        e1 = butterfly(jnp.where(pos1, e, 0.0), jnp.add)   # class-1 exp, broadcast
        # softmax(x)[:, 1] > t  <=>  e1 > t * denom   (no reciprocal needed)
        o_ref[...] = (e1 > thr * denom).astype(o_ref.dtype)

    return kernel


def _selection_forward_lane_dense(features, threshold, max_block_rows=8192):
    n, c = features.shape
    dtype = features.dtype
    group = _LANES // c                                # voxels per 128-lane row
    thr = jnp.asarray(threshold, jnp.float32).reshape(1, 1)

    rows = pl.cdiv(n, group)
    n_folded = rows * group
    x = features
    if n_folded != n:
        x = jnp.pad(x, ((0, n_folded - n), (0, 0)))
    x = x.reshape(rows, _LANES)                        # free row-major view

    sub = _sublane(dtype)
    block_rows = _choose_block_rows(rows, max_block_rows, sub)

    out = pl.pallas_call(
        _make_lane_dense_kernel(c),
        out_shape=jax.ShapeDtypeStruct((rows, _LANES), dtype),
        grid=(pl.cdiv(rows, block_rows),),
        in_specs=[
            pl.BlockSpec(memory_space=pltpu.MemorySpace.SMEM),
            pl.BlockSpec((block_rows, _LANES), lambda i: (i, 0)),
        ],
        out_specs=pl.BlockSpec((block_rows, _LANES), lambda i: (i, 0)),
        compiler_params=_compiler_params(),
    )(thr, x)

    out = out.reshape(n_folded, c)
    if n_folded != n:
        out = out[:n]
    return out


# --------------------------------------------------------------------------
# Fallback for C that does not divide 128: stable softmax, division-free compare
# --------------------------------------------------------------------------
def _selection_softmax_kernel(thr_ref, x_ref, o_ref):
    x = x_ref[...]
    if x.dtype != jnp.float32:
        x = x.astype(jnp.float32)
    m = jnp.max(x, axis=1, keepdims=True)
    e = jnp.exp(x - m)
    denom = jnp.sum(e, axis=1, keepdims=True)
    thr = thr_ref[0, 0]
    # softmax(x)[:, 1] > t  <=>  e1 > t * denom   (no reciprocal needed)
    mask = (e[:, 1:2] > thr * denom).astype(o_ref.dtype)
    o_ref[...] = jnp.broadcast_to(mask, o_ref.shape)


def _selection_forward_general(features, threshold, max_block_n=8192):
    n, c = features.shape
    dtype = features.dtype
    thr = jnp.asarray(threshold, jnp.float32).reshape(1, 1)

    # The VMEM tile of a (block_n, C) block is lane-padded to a multiple of 128
    # lanes regardless of C; budget ~4 MiB per buffer so double-buffered
    # in + out stays well under the 32 MiB scoped-VMEM limit on every
    # generation (incl. v7x's 64 MiB physical VMEM).
    sub = _sublane(dtype)
    lane_padded = _round_up(c, _LANES)
    budget_rows = max(sub, (4 * 1024 * 1024) // (lane_padded * 4))
    block_n = min(max_block_n, budget_rows, _round_up(n, sub))
    block_n = max(sub, (block_n // sub) * sub)

    # No wrapper pad / slice at all: non-divisible grid masks the partial block.
    out = pl.pallas_call(
        _selection_softmax_kernel,
        out_shape=jax.ShapeDtypeStruct((n, c), dtype),
        grid=(pl.cdiv(n, block_n),),
        in_specs=[
            pl.BlockSpec(memory_space=pltpu.MemorySpace.SMEM),   # threshold
            pl.BlockSpec((block_n, c), lambda i: (i, 0)),        # scores
        ],
        out_specs=pl.BlockSpec((block_n, c), lambda i: (i, 0)),
        compiler_params=_compiler_params(),
    )(thr, features)

    return out


def selection_forward(features, threshold=0.5):
    """features: (N, C) float array, C >= 2.  Returns (N, C) rows of 0.0 / 1.0
    equal to ones_like(features) * (softmax(features, 1)[:, 1] > threshold)."""
    n, c = features.shape
    assert c >= 2, "Selection expects at least 2 class channels"
    if c == 2:
        return _selection_forward_c2(features, threshold)
    if _LANES % c == 0:
        return _selection_forward_lane_dense(features, threshold)
    return _selection_forward_general(features, threshold)


if __name__ == "__main__":
    key = jax.random.PRNGKey(0)
    k1, k2, k3, k4 = jax.random.split(key, 4)

    def reference(scores, threshold):
        p1 = jax.nn.softmax(scores.astype(jnp.float32), axis=1)[:, 1]
        return jnp.ones_like(scores) * (p1 > threshold).astype(scores.dtype)[:, None]

    # 1) Binary-class fast path, ragged N (exercises the <=63-voxel pad tail).
    s1 = jax.random.normal(k1, (250, 2), dtype=jnp.float32)
    o1 = jax.block_until_ready(selection_forward(s1, threshold=0.5))
    assert o1.shape == s1.shape and o1.dtype == s1.dtype
    assert bool(jnp.all(o1 == reference(s1, 0.5)))

    # 2) Binary-class fast path, 64-aligned N (zero-copy wrapper path).
    s2 = jax.random.normal(k2, (512, 2), dtype=jnp.float32)
    o2 = jax.block_until_ready(selection_forward(s2, threshold=0.4))
    assert o2.shape == s2.shape and o2.dtype == s2.dtype
    assert bool(jnp.all(o2 == reference(s2, 0.4)))

    # 3) Lane-dense multi-class path (C divides 128).
    s3 = jax.random.normal(k3, (200, 4), dtype=jnp.float32)
    o3 = jax.block_until_ready(selection_forward(s3, threshold=0.3))
    assert o3.shape == s3.shape and o3.dtype == s3.dtype
    assert bool(jnp.all(o3 == reference(s3, 0.3)))

    # 4) General fallback path (C does not divide 128).
    s4 = jax.random.normal(k4, (100, 3), dtype=jnp.float32)
    o4 = jax.block_until_ready(selection_forward(s4, threshold=0.6))
    assert o4.shape == s4.shape and o4.dtype == s4.dtype
    assert bool(jnp.all(o4 == reference(s4, 0.6)))

    print("KERNEL_OK")
</pallas_src>

<mosaic_0001>
module attributes {stable_mosaic.version = 11 : i64} {
  func.func @_selection_c2_kernel(%arg0: i32, %arg1: memref<1x1xf32, #tpu.memory_space<smem>>, %arg2: memref<8x128xf32, #tpu.memory_space<vmem>>, %arg3: memref<8x128xf32, #tpu.memory_space<vmem>>) attributes {dimension_semantics = [#tpu.dimension_semantics<parallel>], iteration_bounds = array<i64: 1>, scalar_prefetch = 0 : i64, scratch_operands = 0 : i64, tpu.core_type = #tpu.core_type<tc>, window_params = [{transform_indices = @transform_0, window_bounds = array<i64: 1, 1>}, {transform_indices = @transform_1, window_bounds = array<i64: 8, 128>}, {transform_indices = @transform_2, window_bounds = array<i64: 8, 128>}]} {
    %c0 = arith.constant 0 : index
    %c0_0 = arith.constant 0 : index
    %0 = vector.load %arg2[%c0, %c0_0] : memref<8x128xf32, #tpu.memory_space<vmem>>, vector<8x128xf32>
    %c0_1 = arith.constant 0 : index
    %c0_2 = arith.constant 0 : index
    %1 = memref.load %arg1[%c0_1, %c0_2] : memref<1x1xf32, #tpu.memory_space<smem>>
    %c1_i32 = arith.constant 1 : i32
    %2 = tpu.dynamic_rotate %0 by %c1_i32 dim 1 : vector<8x128xf32>, i32 -> vector<8x128xf32>
    %3 = arith.subf %0, %2 : vector<8x128xf32>
    %4 = vector.broadcast %1 : f32 to vector<8x128xf32>
    %5 = arith.cmpf ogt, %3, %4 : vector<8x128xf32>
    %6 = arith.extui %5 : vector<8x128xi1> to vector<8x128xi32>
    %7 = arith.sitofp %6 : vector<8x128xi32> to vector<8x128xf32>
    %c127_i32 = arith.constant 127 : i32
    %8 = tpu.dynamic_rotate %7 by %c127_i32 dim 1 : vector<8x128xf32>, i32 -> vector<8x128xf32>
    %9 = tpu.iota {dimensions = array<i32: 1>} : vector<8x128xi32>
    %c1_i32_3 = arith.constant 1 : i32
    %10 = vector.broadcast %c1_i32_3 : i32 to vector<8x128xi32>
    %11 = arith.andi %9, %10 : vector<8x128xi32>
    %c1_i32_4 = arith.constant 1 : i32
    %12 = vector.broadcast %c1_i32_4 : i32 to vector<8x128xi32>
    %13 = arith.cmpi eq, %11, %12 : vector<8x128xi32>
    %14 = arith.select %13, %7, %8 : vector<8x128xi1>, vector<8x128xf32>
    %c0_5 = arith.constant 0 : index
    %c0_6 = arith.constant 0 : index
    %15 = vector.load %arg3[%c0_5, %c0_6] : memref<8x128xf32, #tpu.memory_space<vmem>>, vector<8x128xf32>
    tpu.vector_store %arg3[%c0_5, %c0_6], %14 {strides = array<i32>} : memref<8x128xf32, #tpu.memory_space<vmem>>, vector<8x128xf32>,
    return
  }
  func.func @transform_0(%arg0: i32) -> (i32, i32) {
    %c0_i32 = arith.constant 0 : i32
    %c0_i32_0 = arith.constant 0 : i32
    %c0_i32_1 = arith.constant 0 : i32
    return %c0_i32, %c0_i32_0 : i32, i32
  }
  func.func @transform_1(%arg0: i32) -> (i32, i32) {
    %c0_i32 = arith.constant 0 : i32
    %c0_i32_0 = arith.constant 0 : i32
    return %arg0, %c0_i32 : i32, i32
  }
  func.func @transform_2(%arg0: i32) -> (i32, i32) {
    %c0_i32 = arith.constant 0 : i32
    %c0_i32_0 = arith.constant 0 : i32
    return %arg0, %c0_i32 : i32, i32
  }
}

</mosaic_0001>

<llo_original>
// kernel: tpu_custom_call.1
$region0: #{tpu_custom_call.1}
  #allocation0 [shape = 'u32[]', space=smem, size = 0x4, offset = 0x4, fixed_abs, tag = 'smem constant byte address 0x4 - core index']
  #allocation1 [shape = 'u32[144,128]{1,0:T(1,128)}', space=vmem, size = 0x12000, scoped, tag = 'internal scratch']
  #allocation2 [shape = 'f32[1,1]{1,0:T(1,128)S(6)}', space=smem, size = 0x200, scoped, tag = 'scoped memory for tpu_custom_call.1']
  %s0 = inlined_call_operand.<no memory space> [shape: f32[1,1], index: 0, kind: input, shape index: {}]
  %s1 = inlined_call_operand.hbm [shape: f32[4,128], index: 1, kind: input, shape index: {}]
  %s2 = inlined_call_operand.hbm [shape: f32[4,128], index: 2, kind: output, shape index: {}]
  %s3 = sld [smem:[#allocation0]]
  $region22: #{tpu_custom_call.1} parent=0
    _
  %s5 = ssub.s32 1, %s3
  %s6 = scalar_select 0, %s5, %s3
  %7 = sst [smem:[#allocation2]] %s0
  $region1: #{tpu_custom_call.1} parent=0
    #allocation3 [shape = 'u8[4096]{0}', space=vmem, size = 0x1000, scoped, tag = 'input window, operand 1, single buffered']
    #allocation4 [shape = 's32[1]{0}', space=sflag, size = 0x4, scoped, tag = 'scoped memory for tpu_custom_call.1']
    #allocation5 [shape = 's32[1]{0}', space=sflag, size = 0x4, scoped, tag = 'scoped memory for tpu_custom_call.1']
    #allocation6 [shape = 'u8[4096]{0}', space=vmem, size = 0x1000, scoped, tag = 'output window, operand 0, single buffered']
    %8 = vsyncpa [#allocation4], 0
    %9 = vsyncpa [#allocation5], 0
    // Predicated region
    $region2: #{tpu_custom_call.1} parent=1 // pred_check
      _
    $region3: #{tpu_custom_call.1} parent=1 // pred_check_branch
      %11 = sbr.rel (0) target = $region5
    $region4: #{tpu_custom_call.1} parent=1 // pred_region
      _
    $region5: #{tpu_custom_call.1} parent=1 // pred_fallthru
      _
    // Predicated region
    $region6: #{tpu_custom_call.1} parent=1 // pred_check
      _
    $region7: #{tpu_custom_call.1} parent=1 // pred_check_branch
      %13 = sbr.rel (0) target = $region9
    $region8: #{tpu_custom_call.1} parent=1 // pred_region
      %s15 = ssub.s32 128, 64
      %16 = vsyncadd [#allocation4], %s15
      %s17 = sshll.u32 [#allocation3], 4
      %s18 = int_to_ptr.vmem [resolvable:$true] %s17
      %23 = dma.hbm_to_vmem [thread:$0]  %s1, 64, %s18, [#allocation4], 64, 64, 4
    $region9: #{tpu_custom_call.1} parent=1 // pred_fallthru
      _
    // Predicated region
    $region10: #{tpu_custom_call.1} parent=1 // pred_check
      _
    $region11: #{tpu_custom_call.1} parent=1 // pred_check_branch
      %25 = sbr.rel (0) target = $region13
    $region12: #{tpu_custom_call.1} parent=1 // pred_region
      %26 = dma.done [#allocation4], 128
    $region13: #{tpu_custom_call.1} parent=1 // pred_fallthru
      _
    %v27 = vld [vmem:[#allocation3] sm:$0xff]
    %s28 = sld [smem:[#allocation2]]
    %29 = vrot.lane.b32.xlu0 %v27, 1
    %v30 = vpop.permute.xlu0 %29
    %v31 = vsub.f32 %v27, %v30
    %v32 = vstv %s28
    %vm33 = vcmp.gt.f32.partialorder %v31, %v32
    %v34 = vsel %vm33, 1, 0
    %v35 = vcvt.s32.f32 %v34
    %36 = vrot.lane.b32.xlu0 %v35, 127
    %v37 = vpop.permute.xlu0 %36
    %v38 = vlaneseq
    %v39 = vand.u32 %v38, 127
    %v40 = vand.u32 %v39, 1
    %vm41 = vcmp.eq.s32.totalorder %v40, 1
    %v42 = vsel %vm41, %v35, %v37
    %43 = vst [vmem:[#allocation6] sm:$0xff] %v42
    // Predicated region
    $region14: #{tpu_custom_call.1} parent=1 // pred_check
      _
    $region15: #{tpu_custom_call.1} parent=1 // pred_check_branch
      %45 = sbr.rel (0) target = $region17
    $region16: #{tpu_custom_call.1} parent=1 // pred_region
      %s47 = ssub.s32 128, 64
      %48 = vsyncadd [#allocation5], %s47
      %s49 = sshll.u32 [#allocation6], 4
      %s50 = int_to_ptr.vmem [resolvable:$true] %s49
      %55 = dma.vmem_to_hbm [thread:$0]  %s50, 64, %s2, [#allocation5], 64, 64, 4
    $region17: #{tpu_custom_call.1} parent=1 // pred_fallthru
      _
    // Predicated region
    $region18: #{tpu_custom_call.1} parent=1 // pred_check
      _
    $region19: #{tpu_custom_call.1} parent=1 // pred_check_branch
      %57 = sbr.rel (0) target = $region21
    $region20: #{tpu_custom_call.1} parent=1 // pred_region
      %58 = dma.done [#allocation5], 128
    $region21: #{tpu_custom_call.1} parent=1 // pred_fallthru
      _
    %59 = vsyncpa [#allocation4], 1
    %60 = vsyncpa [#allocation5], 1

</llo_original>
